<compile_context>
chip_gen: v6e
topology: v6e:2x2x1
jax: 0.10.0
libtpu: 0.0.40
codegen_flags: <defaults>
</compile_context>

<pallas_src>
import jax
import jax.numpy as jnp
from jax.experimental import pallas as pl
from jax.experimental.pallas import tpu as pltpu


def _round_up(x, m):
    return ((x + m - 1) // m) * m


def _cdiv(a, b):
    return -(-a // b)


def _vmem_budget_and_limit():
    """Generation-aware (budget, limit) in bytes; conservative fallback off-TPU."""
    try:
        cap = pltpu.get_tpu_info().vmem_capacity_bytes
    except Exception:
        cap = 64 * 1024 * 1024
    if cap >= 96 * 1024 * 1024:                    # v5e / v6e: 128 MiB physical
        return 48 * 1024 * 1024, 64 * 1024 * 1024
    return 24 * 1024 * 1024, 40 * 1024 * 1024      # v7x: 64 MiB per TC (or unknown)


def _conv1x1_relu_kernel(w_ref, b_ref, x_ref, o_ref):
    # w: (TCO, C_in) bf16, b: (TCO, 1) f32, x: (C_in, TPIX) bf16, o: (TCO, TPIX)
    y = jnp.dot(w_ref[...], x_ref[...], preferred_element_type=jnp.float32)
    o_ref[...] = jnp.maximum(y + b_ref[...], 0.0).astype(o_ref.dtype)


def conv1x1_relu(x_nchw, weight, bias, *,
                 compute_dtype=jnp.bfloat16,
                 out_dtype=None,
                 max_tile=4096):
    """y = relu(Conv2d(kernel=1, stride=1)(x)), x in NCHW, weight (C_out, C_in, 1, 1)."""
    N, C_in, H, W = x_nchw.shape
    C_out = weight.shape[0]
    HW = H * W

    if compute_dtype is None:
        compute_dtype = x_nchw.dtype
    if out_dtype is None:
        out_dtype = x_nchw.dtype

    vmem_budget_bytes, vmem_limit_bytes = _vmem_budget_and_limit()

    in_bytes = jnp.dtype(compute_dtype).itemsize
    out_bytes = jnp.dtype(out_dtype).itemsize
    w_bytes = jnp.dtype(compute_dtype).itemsize

    # ---- C_out tiling: keep the (double-buffered) resident weight block small ----
    w_block_budget = min(8 * 1024 * 1024, vmem_budget_bytes // 3)
    if C_out * C_in * w_bytes <= w_block_budget:
        tile_cout = C_out
    else:
        t = max(8, w_block_budget // max(1, C_in * w_bytes))
        tile_cout = (t // 256) * 256 if t >= 256 else (t // 8) * 8
        tile_cout = max(8, min(tile_cout, C_out))
    n_cout = _cdiv(C_out, tile_cout)

    # ---- pixel-tile selection: lane-dense (multiple of 128), sized to VMEM budget ----
    # Pallas allocates 2 buffers per input/output block, including the constant-index
    # weight/bias blocks, so count them twice.
    resident = 2 * (tile_cout * C_in * w_bytes + tile_cout * 4)
    per_lane = 2 * (C_in * in_bytes + tile_cout * out_bytes)     # x tile + out tile, 2 bufs
    cap = (vmem_budget_bytes - resident) // per_lane
    cap = max(128, min(max_tile, (cap // 128) * 128))            # clamps to 128 if negative
    tile = min(cap, _round_up(HW, 128))
    n_pix = _cdiv(HW, tile)

    # ---- megacore balance (v7x has 2 TCs): ensure a few grid steps exist ----
    if N * n_cout * n_pix < 4:
        want_pix = _cdiv(4, max(1, N * n_cout))
        tile = max(128, _round_up(_cdiv(HW, want_pix), 128))
        n_pix = _cdiv(HW, tile)

    # (N, C, H, W) -> (N, C, H*W) is a free contiguous view; no transposes, no padding.
    # Ragged pixel / C_out edges are handled by Pallas block masking (cdiv grid).
    x_v = x_nchw.reshape(N, C_in, HW).astype(compute_dtype)
    w2d = weight.reshape(C_out, C_in).astype(compute_dtype)
    b2d = bias.reshape(C_out, 1).astype(jnp.float32)

    cost = pl.CostEstimate(
        flops=2 * N * C_out * C_in * HW,
        transcendentals=0,
        bytes_accessed=(N * C_in * HW * in_bytes
                        + C_out * C_in * w_bytes + C_out * 4
                        + N * C_out * HW * out_bytes),
    )

    out_v = pl.pallas_call(
        _conv1x1_relu_kernel,
        out_shape=jax.ShapeDtypeStruct((N, C_out, HW), out_dtype),
        grid_spec=pltpu.PrefetchScalarGridSpec(
            num_scalar_prefetch=0,
            grid=(N, n_cout, n_pix),
            in_specs=[
                pl.BlockSpec((tile_cout, C_in), lambda n, co, i: (co, 0)),   # weights
                pl.BlockSpec((tile_cout, 1), lambda n, co, i: (co, 0)),      # bias
                pl.BlockSpec((pl.Squeezed(), C_in, tile),
                             lambda n, co, i: (n, 0, i)),                    # x pixel tile
            ],
            out_specs=pl.BlockSpec((pl.Squeezed(), tile_cout, tile),
                                   lambda n, co, i: (n, co, i)),
        ),
        compiler_params=pltpu.CompilerParams(
            dimension_semantics=("parallel", "parallel", "parallel"),
            vmem_limit_bytes=vmem_limit_bytes),
        cost_estimate=cost,
    )(w2d, b2d, x_v)

    return out_v.reshape(N, C_out, H, W)


class Conv3x3Block:
    """JAX mirror of _conv3x3. Only the in_channel != out_channel branch of the
    original forward is executable; that branch is y = relu(conv1x1(x))."""

    def __init__(self, in_channel, out_channel, key):
        self.in_channel = in_channel
        self.out_channel = out_channel
        if in_channel != out_channel:
            # PyTorch Conv2d default init: U(-1/sqrt(fan_in), 1/sqrt(fan_in))
            kw, kb = jax.random.split(key)
            fan_in = in_channel * 1 * 1
            bound = 1.0 / (fan_in ** 0.5)
            self.conv1x1_w = jax.random.uniform(
                kw, (out_channel, in_channel, 1, 1), jnp.float32, -bound, bound)
            self.conv1x1_b = jax.random.uniform(
                kb, (out_channel,), jnp.float32, -bound, bound)
        else:
            self.conv1x1_w = None
            self.conv1x1_b = None

    def __call__(self, x):
        if self.conv1x1_w is None:
            # TODO(synk): original branch `relu(features(x) + x)` is not executable
            # (stride-2 convs shrink H,W so the residual add shape-mismatches);
            # not faked here.
            raise NotImplementedError(
                "in_channel == out_channel branch is broken in the reference")
        return conv1x1_relu(x, self.conv1x1_w, self.conv1x1_b)


if __name__ == "__main__":
    key = jax.random.PRNGKey(0)
    k_x, k_p = jax.random.split(key)

    N, C_in, H, W = 2, 4, 16, 16
    C_out = 8  # != C_in -> the executable forward branch

    x = jax.random.normal(k_x, (N, C_in, H, W), jnp.float32)
    block = Conv3x3Block(C_in, C_out, k_p)

    y = block(x)
    y = jax.block_until_ready(y)

    # Pure-JAX reference for the same forward on the same bf16 data path:
    # relu(1x1 conv + bias), bf16 inputs, f32 accumulation, NCHW.
    w2d = block.conv1x1_w.reshape(C_out, C_in).astype(jnp.bfloat16)
    x_b = x.astype(jnp.bfloat16)
    ref = jnp.einsum("oc,nchw->nohw", w2d, x_b,
                     preferred_element_type=jnp.float32)
    ref = jnp.maximum(ref + block.conv1x1_b[None, :, None, None], 0.0)
    ref = ref.astype(x.dtype)

    assert y.shape == (N, C_out, H, W)
    assert jnp.allclose(y, ref, atol=1e-2, rtol=1e-2)
    print("KERNEL_OK")
</pallas_src>

<mosaic_0001>
module attributes {stable_mosaic.version = 11 : i64} {
  func.func @_conv1x1_relu_kernel(%arg0: i32, %arg1: i32, %arg2: i32, %arg3: memref<8x4xbf16, #tpu.memory_space<vmem>>, %arg4: memref<8x1xf32, #tpu.memory_space<vmem>>, %arg5: memref<1x4x128xbf16, #tpu.memory_space<vmem>>, %arg6: memref<1x8x128xf32, #tpu.memory_space<vmem>>) attributes {dimension_semantics = [#tpu.dimension_semantics<parallel>, #tpu.dimension_semantics<parallel>, #tpu.dimension_semantics<parallel>], iteration_bounds = array<i64: 2, 1, 2>, scalar_prefetch = 0 : i64, scratch_operands = 0 : i64, tpu.core_type = #tpu.core_type<tc>, window_params = [{transform_indices = @transform_0, window_bounds = array<i64: 8, 4>}, {transform_indices = @transform_1, window_bounds = array<i64: 8, 1>}, {transform_indices = @transform_2, window_bounds = array<i64: 1, 4, 128>}, {transform_indices = @transform_3, window_bounds = array<i64: 1, 8, 128>}]} {
    %c0 = arith.constant 0 : index
    %c0_0 = arith.constant 0 : index
    %0 = vector.load %arg3[%c0, %c0_0] : memref<8x4xbf16, #tpu.memory_space<vmem>>, vector<8x4xbf16>
    %c0_1 = arith.constant 0 : index
    %c0_2 = arith.constant 0 : index
    %c0_3 = arith.constant 0 : index
    %1 = vector.load %arg5[%c0_1, %c0_2, %c0_3] : memref<1x4x128xbf16, #tpu.memory_space<vmem>>, vector<1x4x128xbf16>
    %2 = vector.shape_cast %1 : vector<1x4x128xbf16> to vector<4x128xbf16>
    %cst = arith.constant dense<0.000000e+00> : vector<8x128xf32>
    %3 = tpu.matmul %0, %2, %cst {dimension_numbers = #tpu.dot_dimension_numbers<[1], [0], [0], [1], [0, 0, 1, 1], [], []>} : vector<8x4xbf16>, vector<4x128xbf16>, vector<8x128xf32> -> vector<8x128xf32>
    %c0_4 = arith.constant 0 : index
    %c0_5 = arith.constant 0 : index
    %4 = vector.load %arg4[%c0_4, %c0_5] : memref<8x1xf32, #tpu.memory_space<vmem>>, vector<8x1xf32>
    %5 = vector.broadcast %4 : vector<8x1xf32> to vector<8x128xf32>
    %6 = arith.addf %3, %5 : vector<8x128xf32>
    %cst_6 = arith.constant 0.000000e+00 : f32
    %7 = vector.broadcast %cst_6 : f32 to vector<8x128xf32>
    %8 = arith.maximumf %6, %7 : vector<8x128xf32>
    %c0_7 = arith.constant 0 : index
    %c0_8 = arith.constant 0 : index
    %c0_9 = arith.constant 0 : index
    %9 = vector.load %arg6[%c0_7, %c0_8, %c0_9] : memref<1x8x128xf32, #tpu.memory_space<vmem>>, vector<1x8x128xf32>
    %10 = vector.shape_cast %9 : vector<1x8x128xf32> to vector<8x128xf32>
    %11 = vector.shape_cast %8 : vector<8x128xf32> to vector<1x8x128xf32>
    tpu.vector_store %arg6[%c0_7, %c0_8, %c0_9], %11 {strides = array<i32>} : memref<1x8x128xf32, #tpu.memory_space<vmem>>, vector<1x8x128xf32>,
    return
  }
  func.func @transform_0(%arg0: i32, %arg1: i32, %arg2: i32) -> (i32, i32) {
    %c0_i32 = arith.constant 0 : i32
    %c0_i32_0 = arith.constant 0 : i32
    return %arg1, %c0_i32 : i32, i32
  }
  func.func @transform_1(%arg0: i32, %arg1: i32, %arg2: i32) -> (i32, i32) {
    %c0_i32 = arith.constant 0 : i32
    %c0_i32_0 = arith.constant 0 : i32
    return %arg1, %c0_i32 : i32, i32
  }
  func.func @transform_2(%arg0: i32, %arg1: i32, %arg2: i32) -> (i32, i32, i32) {
    %c0_i32 = arith.constant 0 : i32
    %c0_i32_0 = arith.constant 0 : i32
    return %arg0, %c0_i32, %arg2 : i32, i32, i32
  }
  func.func @transform_3(%arg0: i32, %arg1: i32, %arg2: i32) -> (i32, i32, i32) {
    %c0_i32 = arith.constant 0 : i32
    return %arg0, %arg1, %arg2 : i32, i32, i32
  }
}

</mosaic_0001>

<llo_original>
// kernel: tpu_custom_call.1
$region0: #{tpu_custom_call.1}
  #allocation0 [shape = 'u32[]', space=smem, size = 0x4, offset = 0x4, fixed_abs, tag = 'smem constant byte address 0x4 - core index']
  #allocation1 [shape = 'u32[144,128]{1,0:T(1,128)}', space=vmem, size = 0x12000, scoped, tag = 'internal scratch']
  %s0 = inlined_call_operand.vmem [shape: bf16[8,4], index: 0, kind: input, shape index: {}]
  %s1 = inlined_call_operand.vmem [shape: f32[8,1], index: 1, kind: input, shape index: {}]
  %s2 = inlined_call_operand.vmem [shape: bf16[2,4,256], index: 2, kind: input, shape index: {}]
  %s3 = inlined_call_operand.hbm [shape: f32[2,8,256], index: 3, kind: output, shape index: {}]
  %s4 = sld [smem:[#allocation0]]
  $region45: #{tpu_custom_call.1} parent=0
    _
  %s6 = ssub.s32 1, %s4
  %s7 = scalar_select 0, %s6, %s4
  $region1: #{tpu_custom_call.1} parent=0
    #allocation2 [shape = 'u8[8192]{0}', space=vmem, size = 0x2000, scoped, tag = 'output window, operand 0']
    #allocation3 [shape = 's32[2]{0}', space=sflag, size = 0x8, scoped, tag = 'scoped memory for tpu_custom_call.1']
    %8 = vsyncpa [#allocation3], 0
    %s9 = scalar_lea.sflag [#allocation3], 1
    %10 = vsyncpa %s9, 0
    loop: start=0, step=1, limit=6
    $region2: #{tpu_custom_call.1} parent=1 // loop_pre_header
      _
    $region3: #{tpu_custom_call.1} parent=1 // loop_header
      %s12 = sphi 0, %s16
      %p13 = scmp.ge.s32.totalorder %s12, 6
      %s19 = sphi 0, %s38
      %s20 = sphi 0, %s34
      %s21 = sphi 0, %s30
      %s22 = sphi 0, %s19
      %s23 = sphi 0, %s20
      %s24 = sphi 0, %s21
      %s25 = sphi 0, %s22
      %s26 = sphi 0, %s23
      %s27 = sphi 0, %s24
      %s41 = sphi 0, %s43
      %s44 = sphi 0, %s41
      %s45 = sphi 0, %s44
      %s61 = sphi 0, %s45
      %s67 = sphi 0, %s69
      %s70 = sphi 0, %s67
      %s71 = sphi 0, %s70
      %s87 = sphi 0, %s71
      %s95 = sphi 0, %s97
      %s98 = sphi 0, %s95
      %s99 = sphi 0, %s98
      %s115 = sphi 0, %s99
      %s125 = sphi 0, %s127
      %s128 = sphi 0, %s125
      %s129 = sphi 0, %s128
      %s145 = sphi 0, %s129
    $region4: #{tpu_custom_call.1} parent=1 // loop_header_branch
      %15 = sbr.rel (%p13) target = $region8
    $region5: #{tpu_custom_call.1} parent=1 // loop_body
      %s17 = ssub.s32 %s12, 1
      %s18 = ssub.s32 %s12, 2
      %s28 = sadd.s32 1, %s21
      %p29 = scmp.ge.s32.totalorder %s28, 2
      %s30 = scalar_select %p29, 0, %s28
      %s31 = sadd.s32 1, %s20
      %s32 = scalar_select %p29, %s31, %s20
      %p33 = scmp.ge.s32.totalorder %s32, 1
      %s34 = scalar_select %p33, 0, %s32
      %s35 = sadd.s32 1, %s19
      %s36 = scalar_select %p33, %s35, %s19
      %p37 = scmp.ge.s32.totalorder %s36, 2
      %s38 = scalar_select %p37, 0, %s36
      %s39 = ssub.s32 %s20, %s34
      %p40 = scmp.eq.s32.totalorder %s39, 0
      %s42 = sadd.s32 %s41, 1
      %s43 = scalar_select %p40, %s41, %s42
      %p46 = pneg %p40
      %p47 = scmp.eq.s32.totalorder %s12, 3
      %p48 = por %p46, %p47
      %p49 = scmp.ne.s32.totalorder %s41, %s44
      %p50 = scmp.eq.s32.totalorder %s12, 0
      %p51 = por %p49, %p50
      %p52 = scmp.ne.s32.totalorder %s41, %s44
      %p53 = scmp.eq.s32.totalorder %s17, 3
      %p54 = por %p52, %p53
      %p55 = scmp.ne.s32.totalorder %s44, %s45
      %p56 = scmp.eq.s32.totalorder %s17, 0
      %p57 = por %p55, %p56
      %p58 = scmp.ne.s32.totalorder %s44, %s45
      %p59 = scmp.eq.s32.totalorder %s18, 3
      %p60 = por %p58, %p59
      %p62 = scmp.ne.s32.totalorder %s45, %s61
      %p63 = scmp.eq.s32.totalorder %s18, 0
      %p64 = por %p62, %p63
      %s65 = ssub.s32 %s20, %s34
      %p66 = scmp.eq.s32.totalorder %s65, 0
      %s68 = sadd.s32 %s67, 1
      %s69 = scalar_select %p66, %s67, %s68
      %p72 = pneg %p66
      %p73 = scmp.eq.s32.totalorder %s12, 3
      %p74 = por %p72, %p73
      %p75 = scmp.ne.s32.totalorder %s67, %s70
      %p76 = scmp.eq.s32.totalorder %s12, 0
      %p77 = por %p75, %p76
      %p78 = scmp.ne.s32.totalorder %s67, %s70
      %p79 = scmp.eq.s32.totalorder %s17, 3
      %p80 = por %p78, %p79
      %p81 = scmp.ne.s32.totalorder %s70, %s71
      %p82 = scmp.eq.s32.totalorder %s17, 0
      %p83 = por %p81, %p82
      %p84 = scmp.ne.s32.totalorder %s70, %s71
      %p85 = scmp.eq.s32.totalorder %s18, 3
      %p86 = por %p84, %p85
      %p88 = scmp.ne.s32.totalorder %s71, %s87
      %p89 = scmp.eq.s32.totalorder %s18, 0
      %p90 = por %p88, %p89
      %s91 = ssub.s32 %s19, %s38
      %s92 = ssub.s32 %s21, %s30
      %s93 = sor.u32 %s91, %s92
      %p94 = scmp.eq.s32.totalorder %s93, 0
      %s96 = sadd.s32 %s95, 1
      %s97 = scalar_select %p94, %s95, %s96
      %p100 = pneg %p94
      %p101 = scmp.eq.s32.totalorder %s12, 3
      %p102 = por %p100, %p101
      %p103 = scmp.ne.s32.totalorder %s95, %s98
      %p104 = scmp.eq.s32.totalorder %s12, 0
      %p105 = por %p103, %p104
      %p106 = scmp.ne.s32.totalorder %s95, %s98
      %p107 = scmp.eq.s32.totalorder %s17, 3
      %p108 = por %p106, %p107
      %p109 = scmp.ne.s32.totalorder %s98, %s99
      %p110 = scmp.eq.s32.totalorder %s17, 0
      %p111 = por %p109, %p110
      %p112 = scmp.ne.s32.totalorder %s98, %s99
      %p113 = scmp.eq.s32.totalorder %s18, 3
      %p114 = por %p112, %p113
      %p116 = scmp.ne.s32.totalorder %s99, %s115
      %p117 = scmp.eq.s32.totalorder %s18, 0
      %p118 = por %p116, %p117
      %s119 = ssub.s32 %s19, %s38
      %s120 = ssub.s32 %s20, %s34
      %s121 = sor.u32 %s119, %s120
      %s122 = ssub.s32 %s21, %s30
      %s123 = sor.u32 %s121, %s122
      %p124 = scmp.eq.s32.totalorder %s123, 0
      %s126 = sadd.s32 %s125, 1
      %s127 = scalar_select %p124, %s125, %s126
      %p130 = pneg %p124
      %p131 = scmp.eq.s32.totalorder %s12, 3
      %p132 = por %p130, %p131
      %p133 = scmp.ne.s32.totalorder %s125, %s128
      %p134 = scmp.eq.s32.totalorder %s12, 0
      %p135 = por %p133, %p134
      %p136 = scmp.ne.s32.totalorder %s125, %s128
      %p137 = scmp.eq.s32.totalorder %s17, 3
      %p138 = por %p136, %p137
      %p139 = scmp.ne.s32.totalorder %s128, %s129
      %p140 = scmp.eq.s32.totalorder %s17, 0
      %p141 = por %p139, %p140
      %p142 = scmp.ne.s32.totalorder %s128, %s129
      %p143 = scmp.eq.s32.totalorder %s18, 3
      %p144 = por %p142, %p143
      %p146 = scmp.ne.s32.totalorder %s129, %s145
      %p147 = scmp.eq.s32.totalorder %s18, 0
      %p148 = por %p146, %p147
      %p149 = scmp.le.s32.totalorder 1, %s12
      %p150 = scmp.lt.s32.totalorder %s12, 5
      %p151 = pnand %p149, %p150
      %p152 = pneg %p151
      // Predicated region
      $region9: #{tpu_custom_call.1} parent=5 // pred_check
        _
      $region10: #{tpu_custom_call.1} parent=5 // pred_check_branch
        %154 = sbr.rel (%p151) target = $region12
      $region11: #{tpu_custom_call.1} parent=5 // pred_region
        %s155 = ssub.s32 %s12, 1
        // Predicated region
        $region13: #{tpu_custom_call.1} parent=11 // pred_check
          %p156 = pneg %p57
        $region14: #{tpu_custom_call.1} parent=11 // pred_check_branch
          %158 = sbr.rel (%p156) target = $region16
        $region15: #{tpu_custom_call.1} parent=11 // pred_region
          %p159 = scmp.lt.s32.totalorder %s23, 0
          %s160 = scalar_select %p159, %s23, 0
          %s161 = smul.addr %s160, 4
          %s162 = scalar_lea.vmem %s0, %s161
        $region16: #{tpu_custom_call.1} parent=11 // pred_fallthru
          _
        // Predicated region
        $region17: #{tpu_custom_call.1} parent=11 // pred_check
          %p163 = pneg %p83
        $region18: #{tpu_custom_call.1} parent=11 // pred_check_branch
          %165 = sbr.rel (%p163) target = $region20
        $region19: #{tpu_custom_call.1} parent=11 // pred_region
          %p166 = scmp.lt.s32.totalorder %s23, 0
          %s167 = scalar_select %p166, %s23, 0
          %s168 = smul.addr %s167, 8
          %s169 = scalar_lea.vmem %s1, %s168
        $region20: #{tpu_custom_call.1} parent=11 // pred_fallthru
          _
      $region12: #{tpu_custom_call.1} parent=5 // pred_fallthru
        _
      %p170 = scmp.lt.s32.totalorder %s12, 4
      // Predicated region
      $region21: #{tpu_custom_call.1} parent=5 // pred_check
        %p171 = pneg %p170
      $region22: #{tpu_custom_call.1} parent=5 // pred_check_branch
        %173 = sbr.rel (%p171) target = $region24
      $region23: #{tpu_custom_call.1} parent=5 // pred_region
        // Predicated region
        $region25: #{tpu_custom_call.1} parent=23 // pred_check
          %p174 = pneg %p105
        $region26: #{tpu_custom_call.1} parent=23 // pred_check_branch
          %176 = sbr.rel (%p174) target = $region28
        $region27: #{tpu_custom_call.1} parent=23 // pred_region
          %p177 = scmp.lt.s32.totalorder %s19, 1
          %s178 = scalar_select %p177, %s19, 1
          %p179 = scmp.lt.s32.totalorder %s21, 1
          %s180 = scalar_select %p179, %s21, 1
          %s181 = smul.addr %s178, 2
          %s182 = sadd.s32 %s180, %s181
          %s183 = smul.addr %s182, 2
          %s184 = scalar_lea.vmem %s2, %s183
        $region28: #{tpu_custom_call.1} parent=23 // pred_fallthru
          _
      $region24: #{tpu_custom_call.1} parent=5 // pred_fallthru
        _
      %p185 = scmp.le.s32.totalorder 1, %s12
      %p186 = scmp.lt.s32.totalorder %s12, 5
      %p187 = pnand %p185, %p186
      %p188 = pneg %p187
      // Predicated region
      $region29: #{tpu_custom_call.1} parent=5 // pred_check
        _
      $region30: #{tpu_custom_call.1} parent=5 // pred_check_branch
        %190 = sbr.rel (%p187) target = $region32
      $region31: #{tpu_custom_call.1} parent=5 // pred_region
        %s191 = ssub.s32 %s12, 1
        %p192 = scmp.lt.s32.totalorder %s23, 0
        %s193 = scalar_select %p192, %s23, 0
        %s194 = smul.addr %s193, 4
        %s195 = scalar_lea.vmem %s0, %s194
        %p196 = pneg %p57
        %p197 = pneg %p54
        %p198 = scmp.lt.s32.totalorder %s23, 0
        %s199 = scalar_select %p198, %s23, 0
        %s200 = smul.addr %s199, 8
        %s201 = scalar_lea.vmem %s1, %s200
        %p202 = pneg %p83
        %p203 = pneg %p80
        %p204 = scmp.lt.s32.totalorder %s22, 1
        %s205 = scalar_select %p204, %s22, 1
        %p206 = scmp.lt.s32.totalorder %s24, 1
        %s207 = scalar_select %p206, %s24, 1
        %s208 = smul.addr %s205, 2
        %s209 = sadd.s32 %s207, %s208
        %s210 = smul.addr %s209, 2
        %s211 = scalar_lea.vmem %s2, %s210
        %p212 = pneg %p111
        %p213 = pneg %p108
        %p214 = pneg %p141
        %p215 = pneg %p138
        %s216 = sand.u32 %s128, 1
        %s217 = scalar_lea.sflag [#allocation3], %s216
        %s218 = sand.u32 %s128, 1
        %s219 = smul.addr %s218, 8
        %s220 = scalar_lea.vmem [#allocation2], %s219
        %p221 = scmp.lt.s32.totalorder %s23, 0
        %s222 = scalar_select %p221, %s23, 0
        %s223 = smul.addr %s222, 4
        %s224 = scalar_lea.vmem %s0, %s223
        %p225 = scmp.lt.s32.totalorder %s23, 0
        %s226 = scalar_select %p225, %s23, 0
        %s227 = smul.addr %s226, 8
        %s228 = scalar_lea.vmem %s1, %s227
        %p229 = scmp.lt.s32.totalorder %s22, 1
        %s230 = scalar_select %p229, %s22, 1
        %p231 = scmp.lt.s32.totalorder %s24, 1
        %s232 = scalar_select %p231, %s24, 1
        %s233 = smul.addr %s230, 2
        %s234 = sadd.s32 %s232, %s233
        %s235 = smul.addr %s234, 2
        %s236 = scalar_lea.vmem %s2, %s235
        %v238 = vld [vmem:[%s224] sm:$0xf]
        %v239 = vld [vmem:[%s236] sm:$0x3]
        %v240 = vld [vmem:[%s228] sm:$0xff]
        %242 = vset.pattern.permute.xlu0 0
        %243 = vperm.xlu0 %242, %v240
        %v244 = vpop.permute.xlu0 %243
        %vm246 = vcmask 31744
        %v248 = vsel %vm246, %v238, 0
        %vm250 = vcmask 1041408
        %v252 = vsel %vm250, %v239, 0
        %254 = vmatprep.subr.bf16.mxu0 0
        %255 = vmatpush1.bf16.msra.mxu0 0
        %256 = vmatprep.subr.bf16.mxu0 0
        %257 = vmatpush1.bf16.msra.mxu0 0
        %258 = vmatprep.subr.bf16.mxu0 0
        %259 = vmatpush1.bf16.msra.mxu0 0
        %260 = vmatprep.subr.bf16.mxu0 0
        %261 = vmatpush1.bf16.msra.mxu0 0
        %262 = vmatprep.subr.bf16.mxu0 0
        %263 = vmatpush1.bf16.msra.mxu0 0
        %264 = vmatprep.subr.bf16.mxu0 0
        %265 = vmatpush1.bf16.msra.mxu0 0
        %266 = vmatprep.subr.bf16.mxu0 0
        %267 = vmatpush1.bf16.msra.mxu0 0
        %268 = vmatprep.subr.bf16.mxu0 0
        %269 = vmatpush1.bf16.msra.mxu0 %v252
        %270 = vmatprep.subr.bf16.mxu0 0
        %271 = vmatpush2.bf16.msra.mxu0 0
        %272 = vmatprep.subr.bf16.mxu0 0
        %273 = vmatpush2.bf16.msra.mxu0 0
        %274 = vmatprep.subr.bf16.mxu0 0
        %275 = vmatpush2.bf16.msra.mxu0 0
        %276 = vmatprep.subr.bf16.mxu0 0
        %277 = vmatpush2.bf16.msra.mxu0 0
        %278 = vmatprep.subr.bf16.mxu0 0
        %279 = vmatpush2.bf16.msra.mxu0 0
        %280 = vmatprep.subr.bf16.mxu0 0
        %281 = vmatpush2.bf16.msra.mxu0 0
        %282 = vmatprep.subr.bf16.mxu0 0
        %283 = vmatpush2.bf16.msra.mxu0 0
        %284 = vmatprep.subr.bf16.mxu0 0
        %285 = vmatpush2.bf16.msra.mxu0 0
        %286 = vmatprep.mubr.bf16.mxu0 0
        %287 = vmatmul.mubr.bf16.gmra.mxu0 %v248
        %v288 = vpop.f32.mrf.mxu0
        %v289 = vadd.f32 %v244, %v288
        %v290 = vpop.f32.mrf.mxu0
        %v291 = vpop.f32.mrf.mxu0
        %v292 = vpop.f32.mrf.mxu0
        %293 = vdwg.mxu0
        %v294 = vmax.f32 %v289, 0.0
        %295 = vst [vmem:[%s220] sm:$0xff] %v294
        %s296 = sand.u32 %s128, 1
        %s297 = scalar_lea.sflag [#allocation3], %s296
        %s298 = sand.u32 %s128, 1
        %s299 = smul.addr %s298, 8
        %s300 = scalar_lea.vmem [#allocation2], %s299
        // Predicated region
        $region33: #{tpu_custom_call.1} parent=31 // pred_check
          %p301 = pneg %p138
        $region34: #{tpu_custom_call.1} parent=31 // pred_check_branch
          %303 = sbr.rel (%p301) target = $region36
        $region35: #{tpu_custom_call.1} parent=31 // pred_region
          %s305 = ssub.s32 128, 128
          %306 = vsyncadd %s297, %s305
          %s307 = smul.addr %s23, 2
          %s308 = sadd.s32 %s24, %s307
          %s309 = smul.addr %s22, 2
          %s310 = sadd.s32 %s308, %s309
          %s311 = smul.addr %s310, 128
          %s312 = scalar_lea.hbm %s3, %s311
          %s314 = sshll.u32 %s300, 4
          %s315 = int_to_ptr.vmem [resolvable:$true] %s314
          %317 = dma.vmem_to_hbm [thread:$0]  %s315, 128, %s312, %s297
        $region36: #{tpu_custom_call.1} parent=31 // pred_fallthru
          _
      $region32: #{tpu_custom_call.1} parent=5 // pred_fallthru
        _
      %p318 = scmp.le.s32.totalorder 2, %s12
      // Predicated region
      $region37: #{tpu_custom_call.1} parent=5 // pred_check
        %p319 = pneg %p318
      $region38: #{tpu_custom_call.1} parent=5 // pred_check_branch
        %321 = sbr.rel (%p319) target = $region40
      $region39: #{tpu_custom_call.1} parent=5 // pred_region
        %s322 = ssub.s32 %s12, 2
        // Predicated region
        $region41: #{tpu_custom_call.1} parent=39 // pred_check
          %p323 = pneg %p144
        $region42: #{tpu_custom_call.1} parent=39 // pred_check_branch
          %325 = sbr.rel (%p323) target = $region44
        $region43: #{tpu_custom_call.1} parent=39 // pred_region
          %s326 = sand.u32 %s129, 1
          %s327 = scalar_lea.sflag [#allocation3], %s326
          %s328 = sand.u32 %s129, 1
          %s329 = smul.addr %s328, 8
          %s330 = scalar_lea.vmem [#allocation2], %s329
          %331 = dma.done %s327, 128
        $region44: #{tpu_custom_call.1} parent=39 // pred_fallthru
          _
      $region40: #{tpu_custom_call.1} parent=5 // pred_fallthru
        _
    $region6: #{tpu_custom_call.1} parent=1 // loop_footer
      %s16 = sadd.s32 1, %s12
    $region7: #{tpu_custom_call.1} parent=1 // loop_footer_branch
      %11 = sbr.rel target = $region3
    $region8: #{tpu_custom_call.1} parent=1 // loop_exit
      _
    %332 = vsyncpa [#allocation3], 1
    %s333 = scalar_lea.sflag [#allocation3], 1
    %334 = vsyncpa %s333, 1

</llo_original>
